<compile_context>
chip_gen: v5e
topology: v5e:2x2
jax: 0.10.0
libtpu: 0.0.40
codegen_flags: <defaults>
</compile_context>

<pallas_src>
import numpy as np
import jax
import jax.numpy as jnp
from jax import lax
from jax.experimental import pallas as pl
from jax.experimental.pallas import tpu as pltpu

LN_EPS = 1e-5  # PyTorch LayerNorm default


# ---------------------------------------------------------------------------
# Kernel 1: LayerNorm over the last dim of m (single grid step)
# ---------------------------------------------------------------------------
def _m_layernorm_kernel(m_ref, g_ref, b_ref, out_ref):
    x = m_ref[...].astype(jnp.float32)               # (N, c_m)
    mean = jnp.mean(x, axis=-1, keepdims=True)
    xc = x - mean
    var = jnp.mean(xc * xc, axis=-1, keepdims=True)
    out_ref[...] = (xc * lax.rsqrt(var + LN_EPS) * g_ref[...]
                    + b_ref[...]).astype(out_ref.dtype)


def layernorm_m(m, gamma, beta):
    n, c_m = m.shape
    g2 = gamma.reshape(1, c_m).astype(jnp.float32)
    b2 = beta.reshape(1, c_m).astype(jnp.float32)
    return pl.pallas_call(
        _m_layernorm_kernel,
        out_shape=jax.ShapeDtypeStruct((n, c_m), m.dtype),
        grid=(1,),
        in_specs=[
            pl.BlockSpec((n, c_m), lambda i: (0, 0)),
            pl.BlockSpec((1, c_m), lambda i: (0, 0)),
            pl.BlockSpec((1, c_m), lambda i: (0, 0)),
        ],
        out_specs=pl.BlockSpec((n, c_m), lambda i: (0, 0)),
    )(m, g2, b2)


# ---------------------------------------------------------------------------
# Kernel 2: fused z path, 2-D tiled:
#   z_update = LayerNorm(z) + Linear(fourier_encode_dist(||x_i - x_j||))
# ---------------------------------------------------------------------------
def _z_kernel(z_ref, xi_ref, xjt_ref, g_ref, b_ref, w_sc_ref, w_d_ref,
              scale_ref, phase_ref, out_ref):
    # --- LayerNorm over c_z (last dim; full extent in the tile) ---
    z = z_ref[...].astype(jnp.float32)               # (bm, bn, c_z)
    mean = jnp.mean(z, axis=-1, keepdims=True)
    zc = z - mean                                    # hoisted, reused twice
    var = jnp.mean(zc * zc, axis=-1, keepdims=True)
    # b_ref already contains beta_z + linear_bias (folded in the wrapper).
    zn = zc * lax.rsqrt(var + LN_EPS) * g_ref[...] + b_ref[...]

    # --- pairwise distances for this (row-tile, col-tile) ---
    xi = xi_ref[...].astype(jnp.float32)             # (bm, 3)  rows i of tile
    xjt = xjt_ref[...].astype(jnp.float32)           # (3, bn)  cols j of tile
    d2 = ((xi[:, 0:1] - xjt[0:1, :]) ** 2
          + (xi[:, 1:2] - xjt[1:2, :]) ** 2
          + (xi[:, 2:3] - xjt[2:3, :]) ** 2)         # (bm, bn)
    # Keep jnp.sqrt (NOT d2 * rsqrt(d2)): the diagonal d=0 must stay 0.
    d = jnp.sqrt(d2)                                 # (bm, bn)

    # --- fourier encoding: single sin with phase offset (cos = sin(t+pi/2)) ---
    # t[..., k] = d * inv_scale[k] + phase[k], k in [0, 2D)
    # TODO(synk): if v7x profiling still shows EUP/VMEM pressure from the
    # 2D->128 lane padding, restructure the slab as (bm, 2D, bn) (channel on
    # sublanes) with a transposed matmul.
    t = d[:, :, None] * scale_ref[...][None] + phase_ref[...][None]  # (bm,bn,2D)
    enc = jnp.sin(t).astype(jnp.bfloat16)            # bf16 feed to the MXU

    bm, bn = d.shape
    lin = jnp.dot(enc.reshape(bm * bn, -1), w_sc_ref[...],
                  preferred_element_type=jnp.float32)          # (bm*bn, c_z)
    lin = lin.reshape(bm, bn, -1)
    # Raw-distance channel kept in fp32 (bf16 would lose ~0.4% of d).
    lin = lin + d[:, :, None] * w_d_ref[...][None]             # (bm, bn, c_z)

    out_ref[...] = (zn + lin).astype(out_ref.dtype)


def _vmem_capacity_bytes():
    try:
        return int(pltpu.get_tpu_info().vmem_capacity_bytes)
    except Exception:
        return 64 << 20  # conservative (v7x-sized) fallback


def _default_budgets():
    cap = _vmem_capacity_bytes()
    if cap >= (96 << 20):              # v5e / v6e: 128 MiB physical VMEM
        return 8 << 20, 96 << 20       # z_tile_bytes, vmem_limit_bytes
    return 4 << 20, 40 << 20           # v7x: 64 MiB physical VMEM


def _z_tile_shape(n, c_z, itemsize, z_tile_bytes):
    # Column tile is the lane axis of the (3, N) coordinate operand and the
    # inner contiguous HBM run of each z DMA: prefer big multiples of 128.
    if n >= 512:
        bn = 512
    elif n >= 256:
        bn = 256
    elif n >= 128:
        bn = 128
    else:
        bn = n                          # full extent (no 128-divisibility needed)
    # Row tile sized so one z tile is ~z_tile_bytes; it is the sublane axis of
    # the (N, 3) coordinate operand, so keep it a multiple of 8 (or full).
    bm = z_tile_bytes // max(1, bn * c_z * itemsize)
    bm = max(8, (bm // 8) * 8)
    if bm >= n:
        bm = n
    return bm, bn


def z_update_fused(z, x, gamma_z, beta_z, lin_w, lin_b, *, dis_encoding_dim,
                   z_tile_bytes=None, vmem_limit_bytes=None, inplace=False):
    n, n2, c_z = z.shape
    assert n == n2, "pair embedding must be square"
    d_enc = dis_encoding_dim
    two_d = 2 * d_enc
    itemsize = jnp.dtype(z.dtype).itemsize

    default_tile, default_vmem = _default_budgets()
    if z_tile_bytes is None:
        z_tile_bytes = default_tile
    if vmem_limit_bytes is None:
        vmem_limit_bytes = default_vmem

    bm, bn = _z_tile_shape(n, c_z, itemsize, z_tile_bytes)

    # Lane-dense coordinate layouts: (N, 3) for the row side (residues on
    # sublanes), (3, N) for the column side (residues on lanes).
    x_t = jnp.transpose(x)                                    # (3, N)

    g2 = gamma_z.reshape(1, c_z).astype(jnp.float32)
    # Fold the Linear bias into the LayerNorm beta.
    b2 = (beta_z + lin_b).reshape(1, c_z).astype(jnp.float32)

    # sin/cos rows of W feed the MXU in bf16; the raw-distance row stays fp32.
    w_sc = lin_w[:two_d].astype(jnp.bfloat16)                 # (2D, c_z)
    w_d = lin_w[two_d:].astype(jnp.float32)                   # (1, c_z)

    # Encoding lane vectors, passed as operands (NOT closure constants):
    #   scale[k] = 2^-k (duplicated for sin and cos lanes)
    #   phase[k] = 0 for sin lanes, pi/2 for cos lanes (cos t = sin(t + pi/2))
    inv = 2.0 ** (-np.arange(d_enc, dtype=np.float32))
    scale = jnp.asarray(np.concatenate([inv, inv]).reshape(1, two_d))
    phase = jnp.asarray(np.concatenate(
        [np.zeros(d_enc, np.float32),
         np.full(d_enc, np.pi / 2.0, np.float32)]).reshape(1, two_d))

    grid = (pl.cdiv(n, bm), pl.cdiv(n, bn))
    # NOTE: with production c_z (128/256) the output tile is lane-dense; for
    # sub-128 c_z (as in the small test config) stores fall back to masked vst.
    return pl.pallas_call(
        _z_kernel,
        out_shape=jax.ShapeDtypeStruct((n, n, c_z), z.dtype),
        grid=grid,
        in_specs=[
            pl.BlockSpec((bm, bn, c_z), lambda i, j: (i, j, 0)),      # z tile
            pl.BlockSpec((bm, 3), lambda i, j: (i, 0)),               # x rows i
            pl.BlockSpec((3, bn), lambda i, j: (0, j)),               # x cols j
            pl.BlockSpec((1, c_z), lambda i, j: (0, 0)),              # gamma_z
            pl.BlockSpec((1, c_z), lambda i, j: (0, 0)),              # beta+bias
            pl.BlockSpec((two_d, c_z), lambda i, j: (0, 0)),          # W sin/cos
            pl.BlockSpec((1, c_z), lambda i, j: (0, 0)),              # W distance
            pl.BlockSpec((1, two_d), lambda i, j: (0, 0)),            # inv scales
            pl.BlockSpec((1, two_d), lambda i, j: (0, 0)),            # phases
        ],
        out_specs=pl.BlockSpec((bm, bn, c_z), lambda i, j: (i, j, 0)),
        input_output_aliases=({0: 0} if inplace else {}),
        compiler_params=pltpu.CompilerParams(
            dimension_semantics=("parallel", "parallel"),
            vmem_limit_bytes=vmem_limit_bytes),
    )(z, x, x_t, g2, b2, w_sc, w_d, scale, phase)


# ---------------------------------------------------------------------------
# Module wrapper (parameter container + forward)
# ---------------------------------------------------------------------------
def recycling_embedder2_forward(params, m, z, x, *, dis_encoding_dim,
                                inplace=False):
    # TODO(synk): the PyTorch `inplace_safe` branch also copies m_update into
    # m; only the z buffer is aliased here (input_output_aliases) when
    # inplace=True.
    m_update = layernorm_m(m, params["ln_m_w"], params["ln_m_b"])
    z_upd = z_update_fused(
        z, x,
        params["ln_z_w"], params["ln_z_b"],
        params["lin_w"], params["lin_b"],
        dis_encoding_dim=dis_encoding_dim,
        inplace=inplace,
    )
    return m_update, z_upd


# ---------------------------------------------------------------------------
# Pure-JAX reference (mirrors the PyTorch forward) for correctness check
# ---------------------------------------------------------------------------
def _reference(params, m, z, x, dis_encoding_dim):
    def ln(v, w, b):
        mu = jnp.mean(v, -1, keepdims=True)
        var = jnp.mean((v - mu) ** 2, -1, keepdims=True)
        return (v - mu) / jnp.sqrt(var + LN_EPS) * w + b

    m_update = ln(m, params["ln_m_w"], params["ln_m_b"])
    z_update = ln(z, params["ln_z_w"], params["ln_z_b"])
    d = jnp.linalg.norm(x[:, None, :] - x[None, :, :], axis=-1)
    scales = 2.0 ** jnp.arange(dis_encoding_dim, dtype=d.dtype)
    ds = d[..., None] / scales
    enc = jnp.concatenate([jnp.sin(ds), jnp.cos(ds), d[..., None]], axis=-1)
    z_update = z_update + enc @ params["lin_w"] + params["lin_b"]
    return m_update, z_update


if __name__ == "__main__":
    # Small shapes consistent with the module.
    N_res, c_m, c_z, dis_encoding_dim = 8, 32, 16, 4

    key = jax.random.PRNGKey(0)
    k = jax.random.split(key, 9)
    m = jax.random.normal(k[0], (N_res, c_m), jnp.float32)
    z = jax.random.normal(k[1], (N_res, N_res, c_z), jnp.float32)
    x = jax.random.normal(k[2], (N_res, 3), jnp.float32) * 3.0

    # Deterministic synthetic parameters (no checkpoint load).
    params = {
        "ln_m_w": 1.0 + 0.1 * jax.random.normal(k[3], (c_m,), jnp.float32),
        "ln_m_b": 0.1 * jax.random.normal(k[4], (c_m,), jnp.float32),
        "ln_z_w": 1.0 + 0.1 * jax.random.normal(k[5], (c_z,), jnp.float32),
        "ln_z_b": 0.1 * jax.random.normal(k[6], (c_z,), jnp.float32),
        # PyTorch Linear weight is [c_z, in]; we store the transposed [in, c_z]
        # with rows in [sin..., cos..., d] order (same as the encoding).
        "lin_w": 0.2 * jax.random.normal(
            k[7], (2 * dis_encoding_dim + 1, c_z), jnp.float32),
        "lin_b": 0.1 * jax.random.normal(k[8], (c_z,), jnp.float32),
    }

    m_upd, z_upd = recycling_embedder2_forward(
        params, m, z, x, dis_encoding_dim=dis_encoding_dim)
    jax.block_until_ready((m_upd, z_upd))

    m_ref, z_ref = _reference(params, m, z, x, dis_encoding_dim)
    assert jnp.allclose(m_upd, m_ref, atol=1e-4, rtol=1e-4), "m mismatch"
    # z tolerance reflects the intentional bf16 MXU path for the sin/cos part
    # of the Fourier linear (values in [-1,1], ~2^-9 relative rounding).
    assert jnp.allclose(z_upd, z_ref, atol=2e-2, rtol=2e-2), "z mismatch"

    print("KERNEL_OK")
</pallas_src>

<mosaic_0001>
module attributes {stable_mosaic.version = 11 : i64} {
  func.func @_m_layernorm_kernel(%arg0: i32, %arg1: memref<8x32xf32, #tpu.memory_space<vmem>>, %arg2: memref<1x32xf32, #tpu.memory_space<vmem>>, %arg3: memref<1x32xf32, #tpu.memory_space<vmem>>, %arg4: memref<8x32xf32, #tpu.memory_space<vmem>>) attributes {dimension_semantics = [#tpu.dimension_semantics<arbitrary>], iteration_bounds = array<i64: 1>, scalar_prefetch = 0 : i64, scratch_operands = 0 : i64, tpu.core_type = #tpu.core_type<tc>, window_params = [{pipeline_mode = #tpu.pipeline_mode<synchronous>, transform_indices = @transform_0, window_bounds = array<i64: 8, 32>}, {pipeline_mode = #tpu.pipeline_mode<synchronous>, transform_indices = @transform_1, window_bounds = array<i64: 1, 32>}, {pipeline_mode = #tpu.pipeline_mode<synchronous>, transform_indices = @transform_2, window_bounds = array<i64: 1, 32>}, {pipeline_mode = #tpu.pipeline_mode<synchronous>, transform_indices = @transform_3, window_bounds = array<i64: 8, 32>}]} {
    %c0 = arith.constant 0 : index
    %c0_0 = arith.constant 0 : index
    %0 = vector.load %arg1[%c0, %c0_0] : memref<8x32xf32, #tpu.memory_space<vmem>>, vector<8x32xf32>
    %cst = arith.constant dense<0.000000e+00> : vector<8xf32>
    %1 = vector.multi_reduction <add>, %0, %cst [1] : vector<8x32xf32> to vector<8xf32>
    %2 = vector.shape_cast %1 : vector<8xf32> to vector<8x1xf32>
    %cst_1 = arith.constant 3.200000e+01 : f32
    %3 = vector.broadcast %cst_1 : f32 to vector<8x1xf32>
    %4 = arith.divf %2, %3 : vector<8x1xf32>
    %5 = vector.broadcast %4 : vector<8x1xf32> to vector<8x32xf32>
    %6 = arith.subf %0, %5 : vector<8x32xf32>
    %7 = arith.mulf %6, %6 : vector<8x32xf32>
    %cst_2 = arith.constant dense<0.000000e+00> : vector<8xf32>
    %8 = vector.multi_reduction <add>, %7, %cst_2 [1] : vector<8x32xf32> to vector<8xf32>
    %9 = vector.shape_cast %8 : vector<8xf32> to vector<8x1xf32>
    %cst_3 = arith.constant 3.200000e+01 : f32
    %10 = vector.broadcast %cst_3 : f32 to vector<8x1xf32>
    %11 = arith.divf %9, %10 : vector<8x1xf32>
    %cst_4 = arith.constant 9.99999974E-6 : f32
    %12 = vector.broadcast %cst_4 : f32 to vector<8x1xf32>
    %13 = arith.addf %11, %12 : vector<8x1xf32>
    %14 = math.rsqrt %13 : vector<8x1xf32>
    %15 = vector.broadcast %14 : vector<8x1xf32> to vector<8x32xf32>
    %16 = arith.mulf %6, %15 : vector<8x32xf32>
    %c0_5 = arith.constant 0 : index
    %c0_6 = arith.constant 0 : index
    %17 = vector.load %arg2[%c0_5, %c0_6] : memref<1x32xf32, #tpu.memory_space<vmem>>, vector<1x32xf32>
    %18 = vector.broadcast %17 : vector<1x32xf32> to vector<8x32xf32>
    %19 = arith.mulf %16, %18 : vector<8x32xf32>
    %c0_7 = arith.constant 0 : index
    %c0_8 = arith.constant 0 : index
    %20 = vector.load %arg3[%c0_7, %c0_8] : memref<1x32xf32, #tpu.memory_space<vmem>>, vector<1x32xf32>
    %21 = vector.broadcast %20 : vector<1x32xf32> to vector<8x32xf32>
    %22 = arith.addf %19, %21 : vector<8x32xf32>
    %c0_9 = arith.constant 0 : index
    %c0_10 = arith.constant 0 : index
    %23 = vector.load %arg4[%c0_9, %c0_10] : memref<8x32xf32, #tpu.memory_space<vmem>>, vector<8x32xf32>
    tpu.vector_store %arg4[%c0_9, %c0_10], %22 {strides = array<i32>} : memref<8x32xf32, #tpu.memory_space<vmem>>, vector<8x32xf32>,
    return
  }
  func.func @transform_0(%arg0: i32) -> (i32, i32) {
    %c0_i32 = arith.constant 0 : i32
    %c0_i32_0 = arith.constant 0 : i32
    %c0_i32_1 = arith.constant 0 : i32
    return %c0_i32, %c0_i32_0 : i32, i32
  }
  func.func @transform_1(%arg0: i32) -> (i32, i32) {
    %c0_i32 = arith.constant 0 : i32
    %c0_i32_0 = arith.constant 0 : i32
    %c0_i32_1 = arith.constant 0 : i32
    return %c0_i32, %c0_i32_0 : i32, i32
  }
  func.func @transform_2(%arg0: i32) -> (i32, i32) {
    %c0_i32 = arith.constant 0 : i32
    %c0_i32_0 = arith.constant 0 : i32
    %c0_i32_1 = arith.constant 0 : i32
    return %c0_i32, %c0_i32_0 : i32, i32
  }
  func.func @transform_3(%arg0: i32) -> (i32, i32) {
    %c0_i32 = arith.constant 0 : i32
    %c0_i32_0 = arith.constant 0 : i32
    %c0_i32_1 = arith.constant 0 : i32
    return %c0_i32, %c0_i32_0 : i32, i32
  }
}

</mosaic_0001>

<llo_original>
// kernel: tpu_custom_call.1
$region0: #{tpu_custom_call.1}
  #allocation0 [shape = 'u32[]', space=smem, size = 0x4, offset = 0x4, fixed_abs, tag = 'smem constant byte address 0x4 - core index']
  #allocation1 [shape = 'u32[72,128]{1,0:T(1,128)}', space=vmem, size = 0x9000, scoped, tag = 'internal scratch']
  %s0 = inlined_call_operand.hbm [shape: f32[8,32], index: 0, kind: input, shape index: {}]
  %s1 = inlined_call_operand.hbm [shape: f32[1,32], index: 1, kind: input, shape index: {}]
  %s2 = inlined_call_operand.vmem [shape: f32[1,32], index: 2, kind: input, shape index: {}]
  %s3 = inlined_call_operand.hbm [shape: f32[8,32], index: 3, kind: output, shape index: {}]
  %s4 = sld [smem:[#allocation0]]
  $region30: #{tpu_custom_call.1} parent=0
    _
  %s6 = ssub.s32 1, %s4
  %s7 = scalar_select 0, %s6, %s4
  $region1: #{tpu_custom_call.1} parent=0
    #allocation2 [shape = 'u8[4096]{0}', space=vmem, size = 0x1000, scoped, tag = 'input window, operand 0, single buffered']
    #allocation3 [shape = 's32[1]{0}', space=sflag, size = 0x4, scoped, tag = 'scoped memory for tpu_custom_call.1']
    #allocation4 [shape = 's32[1]{0}', space=sflag, size = 0x4, scoped, tag = 'scoped memory for tpu_custom_call.1']
    #allocation5 [shape = 'u8[512]{0}', space=vmem, size = 0x400, scoped, tag = 'input window, operand 1, single buffered']
    #allocation6 [shape = 's32[1]{0}', space=sflag, size = 0x4, scoped, tag = 'scoped memory for tpu_custom_call.1']
    #allocation7 [shape = 'u8[4096]{0}', space=vmem, size = 0x1000, scoped, tag = 'output window, operand 0, single buffered']
    %8 = vsyncpa [#allocation3], 0
    %9 = vsyncpa [#allocation6], 0
    %10 = vsyncpa [#allocation4], 0
    // Predicated region
    $region2: #{tpu_custom_call.1} parent=1 // pred_check
      _
    $region3: #{tpu_custom_call.1} parent=1 // pred_check_branch
      %12 = sbr.rel (0) target = $region5
    $region4: #{tpu_custom_call.1} parent=1 // pred_region
      %14 = vsyncadd [#allocation3], 0
      %s16 = sshll.u32 %s0, 4
      %s17 = int_to_ptr.hbm [resolvable:$true] %s16
      %s18 = sshll.u32 [#allocation2], 4
      %s19 = int_to_ptr.vmem [resolvable:$true] %s18
      %21 = dma.hbm_to_vmem [thread:$0]  %s17, 128, %s19, [#allocation3]
    $region5: #{tpu_custom_call.1} parent=1 // pred_fallthru
      _
    // Predicated region
    $region6: #{tpu_custom_call.1} parent=1 // pred_check
      _
    $region7: #{tpu_custom_call.1} parent=1 // pred_check_branch
      %23 = sbr.rel (0) target = $region9
    $region8: #{tpu_custom_call.1} parent=1 // pred_region
      %25 = vsyncadd [#allocation6], 0
      %s27 = sshll.u32 %s1, 4
      %s28 = int_to_ptr.hbm [resolvable:$true] %s27
      %s29 = sshll.u32 [#allocation5], 4
      %s30 = int_to_ptr.vmem [resolvable:$true] %s29
      %32 = dma.hbm_to_vmem [thread:$0]  %s28, 16, %s30, [#allocation6]
    $region9: #{tpu_custom_call.1} parent=1 // pred_fallthru
      _
    // Predicated region
    $region10: #{tpu_custom_call.1} parent=1 // pred_check
      _
    $region11: #{tpu_custom_call.1} parent=1 // pred_check_branch
      %34 = sbr.rel (0) target = $region13
    $region12: #{tpu_custom_call.1} parent=1 // pred_region
      _
    $region13: #{tpu_custom_call.1} parent=1 // pred_fallthru
      _
    // Predicated region
    $region14: #{tpu_custom_call.1} parent=1 // pred_check
      _
    $region15: #{tpu_custom_call.1} parent=1 // pred_check_branch
      %36 = sbr.rel (0) target = $region17
    $region16: #{tpu_custom_call.1} parent=1 // pred_region
      %38 = dma.done [#allocation3], 128
    $region17: #{tpu_custom_call.1} parent=1 // pred_fallthru
      _
    // Predicated region
    $region18: #{tpu_custom_call.1} parent=1 // pred_check
      _
    $region19: #{tpu_custom_call.1} parent=1 // pred_check_branch
      %40 = sbr.rel (0) target = $region21
    $region20: #{tpu_custom_call.1} parent=1 // pred_region
      %42 = dma.done [#allocation6], 16
    $region21: #{tpu_custom_call.1} parent=1 // pred_fallthru
      _
    %v43 = vld [vmem:[#allocation2] sm:$0xff]
    %vm44 = vcmask 261120
    %v45 = vsel %vm44, %v43, 0.0
    %46 = vadd.xlane.f32.xlu0 %v45
    %v47 = vpop.xlane.xlu0 %46
    %v48 = vrcp.pop 32.0
    %v49 = vmul.f32 32.0, %v48
    %v50 = vsub.f32 1.0, %v49
    %v51 = vmul.f32 %v48, %v50
    %v52 = vadd.f32 %v48, %v51
    %vm53 = vweird.f32 %v48
    %v54 = vsel %vm53, %v48, %v52
    %v55 = vmul.f32 %v47, %v54
    %v56 = vsub.f32 %v43, %v55
    %v57 = vmul.f32 %v56, %v56
    %v58 = vsel %vm44, %v57, 0.0
    %59 = vadd.xlane.f32.xlu0 %v58
    %v60 = vpop.xlane.xlu0 %59
    %v61 = vmul.f32 %v60, %v54
    %v62 = vadd.f32 %v61, 1e-05
    %v63 = vrsqrt.pop %v62
    %v64 = vmul.f32 %v63, %v62
    %v65 = vmul.f32 %v64, %v63
    %v66 = vmul.f32 0.5, %v65
    %v67 = vsub.f32 1.5, %v66
    %v68 = vmul.f32 %v63, %v67
    %vm69 = vweird.f32 %v62
    %vm70 = vweird.f32 %v63
    %vm71 = vmor %vm69, %vm70
    %v72 = vsel %vm71, %v63, %v68
    %v73 = vmul.f32 %v56, %v72
    %v74 = vld [vmem:[#allocation5] sm:$0x1]
    %v76 = vperm.slane %v74, 0
    %v78 = vmul.f32 %v73, %v76
    %v79 = vld [vmem:[%s2] sm:$0x1]
    %v81 = vperm.slane %v79, 0
    %v83 = vadd.f32 %v78, %v81
    %84 = vst.msk [vmem:[#allocation7] sm:$0xff] %vm44, %v83
    // Predicated region
    $region22: #{tpu_custom_call.1} parent=1 // pred_check
      _
    $region23: #{tpu_custom_call.1} parent=1 // pred_check_branch
      %86 = sbr.rel (0) target = $region25
    $region24: #{tpu_custom_call.1} parent=1 // pred_region
      %88 = vsyncadd [#allocation4], 0
      %s90 = sshll.u32 [#allocation7], 4
      %s91 = int_to_ptr.vmem [resolvable:$true] %s90
      %s92 = sshll.u32 %s3, 4
      %s93 = int_to_ptr.hbm [resolvable:$true] %s92
      %95 = dma.vmem_to_hbm [thread:$0]  %s91, 128, %s93, [#allocation4]
    $region25: #{tpu_custom_call.1} parent=1 // pred_fallthru
      _
    // Predicated region
    $region26: #{tpu_custom_call.1} parent=1 // pred_check
      _
    $region27: #{tpu_custom_call.1} parent=1 // pred_check_branch
      %97 = sbr.rel (0) target = $region29
    $region28: #{tpu_custom_call.1} parent=1 // pred_region
      %99 = dma.done [#allocation4], 128
    $region29: #{tpu_custom_call.1} parent=1 // pred_fallthru
      _
    %100 = vsyncpa [#allocation3], 1
    %101 = vsyncpa [#allocation6], 1
    %102 = vsyncpa [#allocation4], 1

</llo_original>
